<compile_context>
chip_gen: v6e
topology: v6e:2x2x1
jax: 0.10.0
libtpu: 0.0.40
codegen_flags: <defaults>
</compile_context>

<pallas_src>
from math import ceil

import jax
import jax.numpy as jnp
from jax.experimental import pallas as pl
from jax.experimental.pallas import tpu as pltpu


def _mlp_kernel(x_ref, w1_ref, b1_ref, w2_ref, b2_ref, o_ref):
    # Layer 1: x @ W1 + b1, then ReLU (dropout is identity: module default dropout=None).
    h = jnp.dot(x_ref[...], w1_ref[...], preferred_element_type=jnp.float32)
    h = h + b1_ref[...]
    h = jnp.maximum(h, 0.0)
    # TODO(synk): training-mode dropout not implemented; module default dropout=None -> identity.
    # Layer 2 (last layer, no activation): h @ W2 + b2.
    out = jnp.dot(h, w2_ref[...], preferred_element_type=jnp.float32)
    out = out + b2_ref[...]
    o_ref[...] = out.astype(o_ref.dtype)


def _round_up(x, m):
    return -(-x // m) * m


def _choose_tile_rows(N, D, H, O, requested=1024, vmem_budget=24 << 20):
    """Pick a row tile: as large as possible while
       (a) double-buffered x/out tiles + resident weights fit a conservative
           VMEM budget (safe for v7x's 64 MiB physical VMEM), and
       (b) large batches still produce >= 2 grid steps (v7x megacore)."""
    # Double-buffered x tile + double-buffered out tile, per row (f32).
    per_row_bytes = 2 * (D + O) * 4
    # Resident weights / biases (be conservative: assume double-buffered).
    fixed_bytes = 2 * (D * H + H + H * O + O) * 4
    max_rows_vmem = max((vmem_budget - fixed_bytes) // per_row_bytes, 8)
    # Keep >= 2 grid steps when the batch is large enough.
    half_n = _round_up(max(N // 2, 1), 8)
    tile = min(requested, max_rows_vmem, half_n)
    tile = max((tile // 8) * 8, 8)
    return int(tile)


def cosine_regression_forward(x, w1, b1, w2, b2, *, tile_rows=None):
    """x: (N, D); w1: (D, H); b1: (1, H); w2: (H, 3); b2: (1, 3) -> (N, 3)."""
    N, D = x.shape
    H = w1.shape[1]
    O = w2.shape[1]

    if tile_rows is None:
        tile_rows = _choose_tile_rows(N, D, H, O)
    tile_rows = max(8, (int(tile_rows) // 8) * 8)

    # Pad the batch up to a multiple of the tile so arbitrary N keeps the
    # large-tile fast path; padded rows are sliced off after the call.
    N_pad = _round_up(N, tile_rows)
    x_in = x if N_pad == N else jnp.pad(x, ((0, N_pad - N), (0, 0)))

    grid = (N_pad // tile_rows,)

    # Explicit VMEM budget so the enlarged tiles keep a 2-deep pipeline.
    needed_vmem = (2 * (tile_rows * D + tile_rows * O) +
                   2 * (D * H + H + H * O + O)) * 4
    vmem_limit = int(min(max(needed_vmem + (4 << 20), 16 << 20), 64 << 20))

    cost = pl.CostEstimate(
        flops=2 * N_pad * (D * H + H * O),
        bytes_accessed=(N_pad * D + D * H + H + H * O + O + N_pad * O) * 4,
        transcendentals=0,
    )

    out = pl.pallas_call(
        _mlp_kernel,
        out_shape=jax.ShapeDtypeStruct((N_pad, O), x.dtype),
        grid_spec=pltpu.PrefetchScalarGridSpec(
            num_scalar_prefetch=0,
            grid=grid,
            in_specs=[
                pl.BlockSpec((tile_rows, D), lambda i: (i, 0)),  # x tile
                pl.BlockSpec((D, H), lambda i: (0, 0)),          # W1 (resident)
                pl.BlockSpec((1, H), lambda i: (0, 0)),          # b1
                pl.BlockSpec((H, O), lambda i: (0, 0)),          # W2
                pl.BlockSpec((1, O), lambda i: (0, 0)),          # b2
            ],
            out_specs=pl.BlockSpec((tile_rows, O), lambda i: (i, 0)),
        ),
        compiler_params=pltpu.CompilerParams(
            dimension_semantics=("parallel",),
            vmem_limit_bytes=vmem_limit,
        ),
        cost_estimate=cost,
    )(x_in, w1, b1, w2, b2)

    return out if N_pad == N else out[:N]


def init_params(key, input_size):
    """Deterministic nn.Linear-style init: U(-1/sqrt(fan_in), 1/sqrt(fan_in))."""
    hidden_size = ceil(input_size / 2)
    out_size = 3
    k1, k2, k3, k4 = jax.random.split(key, 4)

    bound1 = 1.0 / jnp.sqrt(jnp.float32(input_size))
    w1 = jax.random.uniform(k1, (input_size, hidden_size), jnp.float32,
                            minval=-bound1, maxval=bound1)
    b1 = jax.random.uniform(k2, (1, hidden_size), jnp.float32,
                            minval=-bound1, maxval=bound1)

    bound2 = 1.0 / jnp.sqrt(jnp.float32(hidden_size))
    w2 = jax.random.uniform(k3, (hidden_size, out_size), jnp.float32,
                            minval=-bound2, maxval=bound2)
    b2 = jax.random.uniform(k4, (1, out_size), jnp.float32,
                            minval=-bound2, maxval=bound2)
    return w1, b1, w2, b2


if __name__ == "__main__":
    key = jax.random.PRNGKey(0)
    kx, kp = jax.random.split(key)

    batch = 10                # deliberately NOT a multiple of 8: exercises padding path
    input_size = 32           # -> hidden_size = 16, output = 3

    x = jax.random.normal(kx, (batch, input_size), jnp.float32)
    w1, b1, w2, b2 = init_params(kp, input_size)

    out = cosine_regression_forward(x, w1, b1, w2, b2)
    out = jax.block_until_ready(out)

    # Pure-JAX reference for sanity check (forward = Linear -> ReLU -> Linear).
    ref = jnp.maximum(x @ w1 + b1, 0.0) @ w2 + b2
    assert out.shape == (batch, 3)
    assert jnp.allclose(out, ref, atol=1e-5, rtol=1e-5)

    print("KERNEL_OK")
</pallas_src>

<mosaic_0001>
module attributes {stable_mosaic.version = 11 : i64} {
  func.func @_mlp_kernel(%arg0: i32, %arg1: memref<8x32xf32, #tpu.memory_space<vmem>>, %arg2: memref<32x16xf32, #tpu.memory_space<vmem>>, %arg3: memref<1x16xf32, #tpu.memory_space<vmem>>, %arg4: memref<16x3xf32, #tpu.memory_space<vmem>>, %arg5: memref<1x3xf32, #tpu.memory_space<vmem>>, %arg6: memref<8x3xf32, #tpu.memory_space<vmem>>) attributes {dimension_semantics = [#tpu.dimension_semantics<parallel>], iteration_bounds = array<i64: 2>, scalar_prefetch = 0 : i64, scratch_operands = 0 : i64, tpu.core_type = #tpu.core_type<tc>, window_params = [{transform_indices = @transform_0, window_bounds = array<i64: 8, 32>}, {pipeline_mode = #tpu.pipeline_mode<synchronous>, transform_indices = @transform_1, window_bounds = array<i64: 32, 16>}, {pipeline_mode = #tpu.pipeline_mode<synchronous>, transform_indices = @transform_2, window_bounds = array<i64: 1, 16>}, {pipeline_mode = #tpu.pipeline_mode<synchronous>, transform_indices = @transform_3, window_bounds = array<i64: 16, 3>}, {pipeline_mode = #tpu.pipeline_mode<synchronous>, transform_indices = @transform_4, window_bounds = array<i64: 1, 3>}, {transform_indices = @transform_5, window_bounds = array<i64: 8, 3>}]} {
    %c0 = arith.constant 0 : index
    %c0_0 = arith.constant 0 : index
    %0 = vector.load %arg1[%c0, %c0_0] : memref<8x32xf32, #tpu.memory_space<vmem>>, vector<8x32xf32>
    %c0_1 = arith.constant 0 : index
    %c0_2 = arith.constant 0 : index
    %1 = vector.load %arg2[%c0_1, %c0_2] : memref<32x16xf32, #tpu.memory_space<vmem>>, vector<32x16xf32>
    %cst = arith.constant dense<0.000000e+00> : vector<8x16xf32>
    %2 = tpu.matmul %0, %1, %cst {dimension_numbers = #tpu.dot_dimension_numbers<[1], [0], [0], [1], [0, 0, 1, 1], [], []>} : vector<8x32xf32>, vector<32x16xf32>, vector<8x16xf32> -> vector<8x16xf32>
    %c0_3 = arith.constant 0 : index
    %c0_4 = arith.constant 0 : index
    %3 = vector.load %arg3[%c0_3, %c0_4] : memref<1x16xf32, #tpu.memory_space<vmem>>, vector<1x16xf32>
    %4 = vector.broadcast %3 : vector<1x16xf32> to vector<8x16xf32>
    %5 = arith.addf %2, %4 : vector<8x16xf32>
    %cst_5 = arith.constant 0.000000e+00 : f32
    %6 = vector.broadcast %cst_5 : f32 to vector<8x16xf32>
    %7 = arith.maximumf %5, %6 : vector<8x16xf32>
    %c0_6 = arith.constant 0 : index
    %c0_7 = arith.constant 0 : index
    %8 = vector.load %arg4[%c0_6, %c0_7] : memref<16x3xf32, #tpu.memory_space<vmem>>, vector<16x3xf32>
    %cst_8 = arith.constant dense<0.000000e+00> : vector<8x3xf32>
    %9 = tpu.matmul %7, %8, %cst_8 {dimension_numbers = #tpu.dot_dimension_numbers<[1], [0], [0], [1], [0, 0, 1, 1], [], []>} : vector<8x16xf32>, vector<16x3xf32>, vector<8x3xf32> -> vector<8x3xf32>
    %c0_9 = arith.constant 0 : index
    %c0_10 = arith.constant 0 : index
    %10 = vector.load %arg5[%c0_9, %c0_10] : memref<1x3xf32, #tpu.memory_space<vmem>>, vector<1x3xf32>
    %11 = vector.broadcast %10 : vector<1x3xf32> to vector<8x3xf32>
    %12 = arith.addf %9, %11 : vector<8x3xf32>
    %c0_11 = arith.constant 0 : index
    %c0_12 = arith.constant 0 : index
    %13 = vector.load %arg6[%c0_11, %c0_12] : memref<8x3xf32, #tpu.memory_space<vmem>>, vector<8x3xf32>
    tpu.vector_store %arg6[%c0_11, %c0_12], %12 {strides = array<i32>} : memref<8x3xf32, #tpu.memory_space<vmem>>, vector<8x3xf32>,
    return
  }
  func.func @transform_0(%arg0: i32) -> (i32, i32) {
    %c0_i32 = arith.constant 0 : i32
    %c0_i32_0 = arith.constant 0 : i32
    return %arg0, %c0_i32 : i32, i32
  }
  func.func @transform_1(%arg0: i32) -> (i32, i32) {
    %c0_i32 = arith.constant 0 : i32
    %c0_i32_0 = arith.constant 0 : i32
    %c0_i32_1 = arith.constant 0 : i32
    return %c0_i32, %c0_i32_0 : i32, i32
  }
  func.func @transform_2(%arg0: i32) -> (i32, i32) {
    %c0_i32 = arith.constant 0 : i32
    %c0_i32_0 = arith.constant 0 : i32
    %c0_i32_1 = arith.constant 0 : i32
    return %c0_i32, %c0_i32_0 : i32, i32
  }
  func.func @transform_3(%arg0: i32) -> (i32, i32) {
    %c0_i32 = arith.constant 0 : i32
    %c0_i32_0 = arith.constant 0 : i32
    %c0_i32_1 = arith.constant 0 : i32
    return %c0_i32, %c0_i32_0 : i32, i32
  }
  func.func @transform_4(%arg0: i32) -> (i32, i32) {
    %c0_i32 = arith.constant 0 : i32
    %c0_i32_0 = arith.constant 0 : i32
    %c0_i32_1 = arith.constant 0 : i32
    return %c0_i32, %c0_i32_0 : i32, i32
  }
  func.func @transform_5(%arg0: i32) -> (i32, i32) {
    %c0_i32 = arith.constant 0 : i32
    %c0_i32_0 = arith.constant 0 : i32
    return %arg0, %c0_i32 : i32, i32
  }
}

</mosaic_0001>

<llo_original>
// kernel: tpu_custom_call.1
$region0: #{tpu_custom_call.1}
  #allocation0 [shape = 'u32[]', space=smem, size = 0x4, offset = 0x4, fixed_abs, tag = 'smem constant byte address 0x4 - core index']
  #allocation1 [shape = 'u32[144,128]{1,0:T(1,128)}', space=vmem, size = 0x12000, scoped, tag = 'internal scratch']
  %s0 = inlined_call_operand.vmem [shape: f32[16,32], index: 0, kind: input, shape index: {}]
  %s1 = inlined_call_operand.vmem [shape: f32[32,16], index: 1, kind: input, shape index: {}]
  %s2 = inlined_call_operand.vmem [shape: f32[1,16], index: 2, kind: input, shape index: {}]
  %s3 = inlined_call_operand.vmem [shape: f32[16,3], index: 3, kind: input, shape index: {}]
  %s4 = inlined_call_operand.vmem [shape: f32[1,3], index: 4, kind: input, shape index: {}]
  %s5 = inlined_call_operand.vmem [shape: f32[16,3], index: 5, kind: output, shape index: {}]
  %s6 = sld [smem:[#allocation0]]
  $region53: #{tpu_custom_call.1} parent=0
    _
  %s8 = ssub.s32 1, %s6
  %s9 = scalar_select 0, %s8, %s6
  loop: start=0, step=1, limit=4
  $region2: #{tpu_custom_call.1} parent=0 // loop_pre_header
    _
  $region3: #{tpu_custom_call.1} parent=0 // loop_header
    %s11 = sphi 0, %s15
    %p12 = scmp.ge.s32.totalorder %s11, 4
    %s21 = sphi 0, %s23
    %s24 = sphi 0, %s21
    %s25 = sphi 0, %s24
    %s41 = sphi 0, %s25
    %s45 = sphi 0, %s45
    %s47 = sphi 0, %s45
    %s48 = sphi 0, %s47
    %s62 = sphi 0, %s48
    %s66 = sphi 0, %s66
    %s68 = sphi 0, %s66
    %s69 = sphi 0, %s68
    %s83 = sphi 0, %s69
    %s87 = sphi 0, %s87
    %s89 = sphi 0, %s87
    %s90 = sphi 0, %s89
    %s104 = sphi 0, %s90
    %s108 = sphi 0, %s108
    %s110 = sphi 0, %s108
    %s111 = sphi 0, %s110
    %s125 = sphi 0, %s111
    %s131 = sphi 0, %s133
    %s134 = sphi 0, %s131
    %s135 = sphi 0, %s134
    %s151 = sphi 0, %s135
  $region4: #{tpu_custom_call.1} parent=0 // loop_header_branch
    %14 = sbr.rel (%p12) target = $region8
  $region5: #{tpu_custom_call.1} parent=0 // loop_body
    %s16 = ssub.s32 %s11, 1
    %s17 = ssub.s32 %s11, 2
    %s18 = sadd.s32 %s11, 1
    %s19 = ssub.s32 %s11, %s18
    %p20 = scmp.eq.s32.totalorder %s19, 0
    %s22 = sadd.s32 %s21, 1
    %s23 = scalar_select %p20, %s21, %s22
    %p26 = pneg %p20
    %p27 = scmp.eq.s32.totalorder %s11, 1
    %p28 = por %p26, %p27
    %p29 = scmp.ne.s32.totalorder %s21, %s24
    %p30 = scmp.eq.s32.totalorder %s11, 0
    %p31 = por %p29, %p30
    %p32 = scmp.ne.s32.totalorder %s21, %s24
    %p33 = scmp.eq.s32.totalorder %s16, 1
    %p34 = por %p32, %p33
    %p35 = scmp.ne.s32.totalorder %s24, %s25
    %p36 = scmp.eq.s32.totalorder %s16, 0
    %p37 = por %p35, %p36
    %p38 = scmp.ne.s32.totalorder %s24, %s25
    %p39 = scmp.eq.s32.totalorder %s17, 1
    %p40 = por %p38, %p39
    %p42 = scmp.ne.s32.totalorder %s25, %s41
    %p43 = scmp.eq.s32.totalorder %s17, 0
    %p44 = por %p42, %p43
    %s46 = sadd.s32 %s45, 1
    %p49 = scmp.eq.s32.totalorder %s11, 1
    %p50 = scmp.ne.s32.totalorder %s45, %s47
    %p51 = scmp.eq.s32.totalorder %s11, 0
    %p52 = por %p50, %p51
    %p53 = scmp.ne.s32.totalorder %s45, %s47
    %p54 = scmp.eq.s32.totalorder %s16, 1
    %p55 = por %p53, %p54
    %p56 = scmp.ne.s32.totalorder %s47, %s48
    %p57 = scmp.eq.s32.totalorder %s16, 0
    %p58 = por %p56, %p57
    %p59 = scmp.ne.s32.totalorder %s47, %s48
    %p60 = scmp.eq.s32.totalorder %s17, 1
    %p61 = por %p59, %p60
    %p63 = scmp.ne.s32.totalorder %s48, %s62
    %p64 = scmp.eq.s32.totalorder %s17, 0
    %p65 = por %p63, %p64
    %s67 = sadd.s32 %s66, 1
    %p70 = scmp.eq.s32.totalorder %s11, 1
    %p71 = scmp.ne.s32.totalorder %s66, %s68
    %p72 = scmp.eq.s32.totalorder %s11, 0
    %p73 = por %p71, %p72
    %p74 = scmp.ne.s32.totalorder %s66, %s68
    %p75 = scmp.eq.s32.totalorder %s16, 1
    %p76 = por %p74, %p75
    %p77 = scmp.ne.s32.totalorder %s68, %s69
    %p78 = scmp.eq.s32.totalorder %s16, 0
    %p79 = por %p77, %p78
    %p80 = scmp.ne.s32.totalorder %s68, %s69
    %p81 = scmp.eq.s32.totalorder %s17, 1
    %p82 = por %p80, %p81
    %p84 = scmp.ne.s32.totalorder %s69, %s83
    %p85 = scmp.eq.s32.totalorder %s17, 0
    %p86 = por %p84, %p85
    %s88 = sadd.s32 %s87, 1
    %p91 = scmp.eq.s32.totalorder %s11, 1
    %p92 = scmp.ne.s32.totalorder %s87, %s89
    %p93 = scmp.eq.s32.totalorder %s11, 0
    %p94 = por %p92, %p93
    %p95 = scmp.ne.s32.totalorder %s87, %s89
    %p96 = scmp.eq.s32.totalorder %s16, 1
    %p97 = por %p95, %p96
    %p98 = scmp.ne.s32.totalorder %s89, %s90
    %p99 = scmp.eq.s32.totalorder %s16, 0
    %p100 = por %p98, %p99
    %p101 = scmp.ne.s32.totalorder %s89, %s90
    %p102 = scmp.eq.s32.totalorder %s17, 1
    %p103 = por %p101, %p102
    %p105 = scmp.ne.s32.totalorder %s90, %s104
    %p106 = scmp.eq.s32.totalorder %s17, 0
    %p107 = por %p105, %p106
    %s109 = sadd.s32 %s108, 1
    %p112 = scmp.eq.s32.totalorder %s11, 1
    %p113 = scmp.ne.s32.totalorder %s108, %s110
    %p114 = scmp.eq.s32.totalorder %s11, 0
    %p115 = por %p113, %p114
    %p116 = scmp.ne.s32.totalorder %s108, %s110
    %p117 = scmp.eq.s32.totalorder %s16, 1
    %p118 = por %p116, %p117
    %p119 = scmp.ne.s32.totalorder %s110, %s111
    %p120 = scmp.eq.s32.totalorder %s16, 0
    %p121 = por %p119, %p120
    %p122 = scmp.ne.s32.totalorder %s110, %s111
    %p123 = scmp.eq.s32.totalorder %s17, 1
    %p124 = por %p122, %p123
    %p126 = scmp.ne.s32.totalorder %s111, %s125
    %p127 = scmp.eq.s32.totalorder %s17, 0
    %p128 = por %p126, %p127
    %s129 = ssub.s32 %s11, %s18
    %p130 = scmp.eq.s32.totalorder %s129, 0
    %s132 = sadd.s32 %s131, 1
    %s133 = scalar_select %p130, %s131, %s132
    %p136 = pneg %p130
    %p137 = scmp.eq.s32.totalorder %s11, 1
    %p138 = por %p136, %p137
    %p139 = scmp.ne.s32.totalorder %s131, %s134
    %p140 = scmp.eq.s32.totalorder %s11, 0
    %p141 = por %p139, %p140
    %p142 = scmp.ne.s32.totalorder %s131, %s134
    %p143 = scmp.eq.s32.totalorder %s16, 1
    %p144 = por %p142, %p143
    %p145 = scmp.ne.s32.totalorder %s134, %s135
    %p146 = scmp.eq.s32.totalorder %s16, 0
    %p147 = por %p145, %p146
    %p148 = scmp.ne.s32.totalorder %s134, %s135
    %p149 = scmp.eq.s32.totalorder %s17, 1
    %p150 = por %p148, %p149
    %p152 = scmp.ne.s32.totalorder %s135, %s151
    %p153 = scmp.eq.s32.totalorder %s17, 0
    %p154 = por %p152, %p153
    %p155 = scmp.le.s32.totalorder 1, %s11
    %p156 = scmp.lt.s32.totalorder %s11, 3
    %p157 = pnand %p155, %p156
    %p158 = pneg %p157
    // Predicated region
    $region9: #{tpu_custom_call.1} parent=5 // pred_check
      _
    $region10: #{tpu_custom_call.1} parent=5 // pred_check_branch
      %160 = sbr.rel (%p157) target = $region12
    $region11: #{tpu_custom_call.1} parent=5 // pred_region
      %s161 = ssub.s32 %s11, 1
      // Predicated region
      $region13: #{tpu_custom_call.1} parent=11 // pred_check
        %p162 = pneg %p58
      $region14: #{tpu_custom_call.1} parent=11 // pred_check_branch
        %164 = sbr.rel (%p162) target = $region16
      $region15: #{tpu_custom_call.1} parent=11 // pred_region
        _
      $region16: #{tpu_custom_call.1} parent=11 // pred_fallthru
        _
      // Predicated region
      $region17: #{tpu_custom_call.1} parent=11 // pred_check
        %p165 = pneg %p79
      $region18: #{tpu_custom_call.1} parent=11 // pred_check_branch
        %167 = sbr.rel (%p165) target = $region20
      $region19: #{tpu_custom_call.1} parent=11 // pred_region
        _
      $region20: #{tpu_custom_call.1} parent=11 // pred_fallthru
        _
      // Predicated region
      $region21: #{tpu_custom_call.1} parent=11 // pred_check
        %p168 = pneg %p100
      $region22: #{tpu_custom_call.1} parent=11 // pred_check_branch
        %170 = sbr.rel (%p168) target = $region24
      $region23: #{tpu_custom_call.1} parent=11 // pred_region
        _
      $region24: #{tpu_custom_call.1} parent=11 // pred_fallthru
        _
      // Predicated region
      $region25: #{tpu_custom_call.1} parent=11 // pred_check
        %p171 = pneg %p121
      $region26: #{tpu_custom_call.1} parent=11 // pred_check_branch
        %173 = sbr.rel (%p171) target = $region28
      $region27: #{tpu_custom_call.1} parent=11 // pred_region
        _
      $region28: #{tpu_custom_call.1} parent=11 // pred_fallthru
        _
    $region12: #{tpu_custom_call.1} parent=5 // pred_fallthru
      _
    %p174 = scmp.lt.s32.totalorder %s11, 2
    // Predicated region
    $region29: #{tpu_custom_call.1} parent=5 // pred_check
      %p175 = pneg %p174
    $region30: #{tpu_custom_call.1} parent=5 // pred_check_branch
      %177 = sbr.rel (%p175) target = $region32
    $region31: #{tpu_custom_call.1} parent=5 // pred_region
      // Predicated region
      $region33: #{tpu_custom_call.1} parent=31 // pred_check
        %p178 = pneg %p31
      $region34: #{tpu_custom_call.1} parent=31 // pred_check_branch
        %180 = sbr.rel (%p178) target = $region36
      $region35: #{tpu_custom_call.1} parent=31 // pred_region
        %p181 = scmp.lt.s32.totalorder %s11, 1
        %s182 = scalar_select %p181, %s11, 1
        %s183 = smul.addr %s182, 8
        %s184 = scalar_lea.vmem %s0, %s183
      $region36: #{tpu_custom_call.1} parent=31 // pred_fallthru
        _
    $region32: #{tpu_custom_call.1} parent=5 // pred_fallthru
      _
    %p185 = scmp.le.s32.totalorder 1, %s11
    %p186 = scmp.lt.s32.totalorder %s11, 3
    %p187 = pnand %p185, %p186
    %p188 = pneg %p187
    // Predicated region
    $region37: #{tpu_custom_call.1} parent=5 // pred_check
      _
    $region38: #{tpu_custom_call.1} parent=5 // pred_check_branch
      %190 = sbr.rel (%p187) target = $region40
    $region39: #{tpu_custom_call.1} parent=5 // pred_region
      %s191 = ssub.s32 %s11, 1
      %p192 = scmp.lt.s32.totalorder %s16, 1
      %s193 = scalar_select %p192, %s16, 1
      %s194 = smul.addr %s193, 8
      %s195 = scalar_lea.vmem %s0, %s194
      %p196 = pneg %p37
      %p197 = pneg %p34
      %p198 = pneg %p58
      %p199 = pneg %p55
      %p200 = pneg %p79
      %p201 = pneg %p76
      %p202 = pneg %p100
      %p203 = pneg %p97
      %p204 = pneg %p121
      %p205 = pneg %p118
      %p206 = pneg %p147
      %p207 = pneg %p144
      %p208 = scmp.lt.s32.totalorder %s16, 1
      %s209 = scalar_select %p208, %s16, 1
      %s210 = smul.addr %s209, 8
      %s211 = scalar_lea.vmem %s5, %s210
      %p212 = scmp.lt.s32.totalorder %s16, 1
      %s213 = scalar_select %p212, %s16, 1
      %s214 = smul.addr %s213, 8
      %s215 = scalar_lea.vmem %s0, %s214
      %p216 = scmp.lt.s32.totalorder %s16, 1
      %s217 = scalar_select %p216, %s16, 1
      %s218 = smul.addr %s217, 8
      %s219 = scalar_lea.vmem %s5, %s218
      %v220 = vld [vmem:[%s215] sm:$0xff]
      %v221 = vld [vmem:[%s1] sm:$0xff]
      %v222 = vld [vmem:[%s1 + $0x8] sm:$0xff]
      %v223 = vld [vmem:[%s1 + $0x10] sm:$0xff]
      %v224 = vld [vmem:[%s1 + $0x18] sm:$0xff]
      %v225 = vld [vmem:[%s2] sm:$0x1]
      %v227 = vlaneseq
      %v228 = vshrl.u32 %v227, 7
      %v229 = vsub.s32 0, %v228
      %v230 = vrot.slane %v225, %v229
      %vm232 = vcmask 261120
      %v234 = vsel %vm232, %v220, 0
      %236 = vmatprep.subr.mxu0 0.0
      %237 = vmatpush1.msra.mxu0 0.0
      %238 = vmatprep.subr.mxu0 0.0
      %239 = vmatpush1.msra.mxu0 0.0
      %240 = vmatprep.subr.mxu0 0.0
      %241 = vmatpush1.msra.mxu0 0.0
      %242 = vmatprep.subr.mxu0 0.0
      %243 = vmatpush1.msra.mxu0 0.0
      %244 = vmatprep.subr.mxu0 0.0
      %245 = vmatpush1.msra.mxu0 0.0
      %246 = vmatprep.subr.mxu0 0.0
      %247 = vmatpush1.msra.mxu0 0.0
      %248 = vmatprep.subr.mxu0 0.0
      %249 = vmatpush1.msra.mxu0 0.0
      %250 = vmatprep.subr.mxu0 0.0
      %251 = vmatpush1.msra.mxu0 0.0
      %252 = vmatprep.subr.mxu0 0.0
      %253 = vmatpush1.msra.mxu0 0.0
      %254 = vmatprep.subr.mxu0 0.0
      %255 = vmatpush1.msra.mxu0 0.0
      %256 = vmatprep.subr.mxu0 0.0
      %257 = vmatpush1.msra.mxu0 0.0
      %258 = vmatprep.subr.mxu0 0.0
      %259 = vmatpush1.msra.mxu0 0.0
      %260 = vmatprep.subr.mxu0 0.0
      %261 = vmatpush1.msra.mxu0 %v224
      %262 = vmatprep.subr.mxu0 0.0
      %263 = vmatpush1.msra.mxu0 %v223
      %264 = vmatprep.subr.mxu0 0.0
      %265 = vmatpush1.msra.mxu0 %v222
      %266 = vmatprep.subr.mxu0 0.0
      %267 = vmatpush1.msra.mxu0 %v221
      %268 = vmatprep.subr.mxu0 0.0
      %269 = vmatpush2.msra.mxu0 0.0
      %270 = vmatprep.subr.mxu0 0.0
      %271 = vmatpush2.msra.mxu0 0.0
      %272 = vmatprep.subr.mxu0 0.0
      %273 = vmatpush2.msra.mxu0 0.0
      %274 = vmatprep.subr.mxu0 0.0
      %275 = vmatpush2.msra.mxu0 0.0
      %276 = vmatprep.subr.mxu0 0.0
      %277 = vmatpush2.msra.mxu0 0.0
      %278 = vmatprep.subr.mxu0 0.0
      %279 = vmatpush2.msra.mxu0 0.0
      %280 = vmatprep.subr.mxu0 0.0
      %281 = vmatpush2.msra.mxu0 0.0
      %282 = vmatprep.subr.mxu0 0.0
      %283 = vmatpush2.msra.mxu0 0.0
      %284 = vmatprep.subr.mxu0 0.0
      %285 = vmatpush2.msra.mxu0 0.0
      %286 = vmatprep.subr.mxu0 0.0
      %287 = vmatpush2.msra.mxu0 0.0
      %288 = vmatprep.subr.mxu0 0.0
      %289 = vmatpush2.msra.mxu0 0.0
      %290 = vmatprep.subr.mxu0 0.0
      %291 = vmatpush2.msra.mxu0 0.0
      %292 = vmatprep.subr.mxu0 0.0
      %293 = vmatpush2.msra.mxu0 0.0
      %294 = vmatprep.subr.mxu0 0.0
      %295 = vmatpush2.msra.mxu0 0.0
      %296 = vmatprep.subr.mxu0 0.0
      %297 = vmatpush2.msra.mxu0 0.0
      %298 = vmatprep.subr.mxu0 0.0
      %299 = vmatpush2.msra.mxu0 0.0
      %300 = vmatprep.mubr.f32.mxu0 0.0
      %301 = vmatmul.mubr.f32.gmra.mxu0 %v234
      %v302 = vpop.f32.mrf.mxu0
      %v303 = vadd.f32 %v230, %v302
      %v304 = vpop.f32.mrf.mxu0
      %305 = vdwg.mxu0
      %v306 = vmax.f32 %v303, 0.0
      %v307 = vld [vmem:[%s3] sm:$0xff]
      %v308 = vld [vmem:[%s3 + $0x8] sm:$0xff]
      %v309 = vld [vmem:[%s4] sm:$0x1]
      %v311 = vlaneseq
      %v312 = vshrl.u32 %v311, 7
      %v313 = vsub.s32 0, %v312
      %v314 = vrot.slane %v309, %v313
      %vm316 = vcmask 130048
      %v318 = vsel %vm316, %v306, 0
      %320 = vmatprep.subr.mxu0 0.0
      %321 = vmatpush1.msra.mxu0 0.0
      %322 = vmatprep.subr.mxu0 0.0
      %323 = vmatpush1.msra.mxu0 0.0
      %324 = vmatprep.subr.mxu0 0.0
      %325 = vmatpush1.msra.mxu0 0.0
      %326 = vmatprep.subr.mxu0 0.0
      %327 = vmatpush1.msra.mxu0 0.0
      %328 = vmatprep.subr.mxu0 0.0
      %329 = vmatpush1.msra.mxu0 0.0
      %330 = vmatprep.subr.mxu0 0.0
      %331 = vmatpush1.msra.mxu0 0.0
      %332 = vmatprep.subr.mxu0 0.0
      %333 = vmatpush1.msra.mxu0 0.0
      %334 = vmatprep.subr.mxu0 0.0
      %335 = vmatpush1.msra.mxu0 0.0
      %336 = vmatprep.subr.mxu0 0.0
      %337 = vmatpush1.msra.mxu0 0.0
      %338 = vmatprep.subr.mxu0 0.0
      %339 = vmatpush1.msra.mxu0 0.0
      %340 = vmatprep.subr.mxu0 0.0
      %341 = vmatpush1.msra.mxu0 0.0
      %342 = vmatprep.subr.mxu0 0.0
      %343 = vmatpush1.msra.mxu0 0.0
      %344 = vmatprep.subr.mxu0 0.0
      %345 = vmatpush1.msra.mxu0 0.0
      %346 = vmatprep.subr.mxu0 0.0
      %347 = vmatpush1.msra.mxu0 0.0
      %348 = vmatprep.subr.mxu0 0.0
      %349 = vmatpush1.msra.mxu0 %v308
      %350 = vmatprep.subr.mxu0 0.0
      %351 = vmatpush1.msra.mxu0 %v307
      %352 = vmatprep.subr.mxu0 0.0
      %353 = vmatpush2.msra.mxu0 0.0
      %354 = vmatprep.subr.mxu0 0.0
      %355 = vmatpush2.msra.mxu0 0.0
      %356 = vmatprep.subr.mxu0 0.0
      %357 = vmatpush2.msra.mxu0 0.0
      %358 = vmatprep.subr.mxu0 0.0
      %359 = vmatpush2.msra.mxu0 0.0
      %360 = vmatprep.subr.mxu0 0.0
      %361 = vmatpush2.msra.mxu0 0.0
      %362 = vmatprep.subr.mxu0 0.0
      %363 = vmatpush2.msra.mxu0 0.0
      %364 = vmatprep.subr.mxu0 0.0
      %365 = vmatpush2.msra.mxu0 0.0
      %366 = vmatprep.subr.mxu0 0.0
      %367 = vmatpush2.msra.mxu0 0.0
      %368 = vmatprep.subr.mxu0 0.0
      %369 = vmatpush2.msra.mxu0 0.0
      %370 = vmatprep.subr.mxu0 0.0
      %371 = vmatpush2.msra.mxu0 0.0
      %372 = vmatprep.subr.mxu0 0.0
      %373 = vmatpush2.msra.mxu0 0.0
      %374 = vmatprep.subr.mxu0 0.0
      %375 = vmatpush2.msra.mxu0 0.0
      %376 = vmatprep.subr.mxu0 0.0
      %377 = vmatpush2.msra.mxu0 0.0
      %378 = vmatprep.subr.mxu0 0.0
      %379 = vmatpush2.msra.mxu0 0.0
      %380 = vmatprep.subr.mxu0 0.0
      %381 = vmatpush2.msra.mxu0 0.0
      %382 = vmatprep.subr.mxu0 0.0
      %383 = vmatpush2.msra.mxu0 0.0
      %384 = vmatprep.mubr.f32.mxu0 0.0
      %385 = vmatmul.mubr.f32.gmra.mxu0 %v318
      %v386 = vpop.f32.mrf.mxu0
      %v387 = vadd.f32 %v314, %v386
      %v388 = vpop.f32.mrf.mxu0
      %389 = vdwg.mxu0
      %vm390 = vcmask 23552
      %391 = vst.msk [vmem:[%s219] sm:$0xff] %vm390, %v387
      %p392 = scmp.lt.s32.totalorder %s16, 1
      %s393 = scalar_select %p392, %s16, 1
      %s394 = smul.addr %s393, 8
      %s395 = scalar_lea.vmem %s5, %s394
      // Predicated region
      $region41: #{tpu_custom_call.1} parent=39 // pred_check
        %p396 = pneg %p144
      $region42: #{tpu_custom_call.1} parent=39 // pred_check_branch
        %398 = sbr.rel (%p396) target = $region44
      $region43: #{tpu_custom_call.1} parent=39 // pred_region
        _
      $region44: #{tpu_custom_call.1} parent=39 // pred_fallthru
        _
    $region40: #{tpu_custom_call.1} parent=5 // pred_fallthru
      _
    %p399 = scmp.le.s32.totalorder 2, %s11
    // Predicated region
    $region45: #{tpu_custom_call.1} parent=5 // pred_check
      %p400 = pneg %p399
    $region46: #{tpu_custom_call.1} parent=5 // pred_check_branch
      %402 = sbr.rel (%p400) target = $region48
    $region47: #{tpu_custom_call.1} parent=5 // pred_region
      %s403 = ssub.s32 %s11, 2
      // Predicated region
      $region49: #{tpu_custom_call.1} parent=47 // pred_check
        %p404 = pneg %p150
      $region50: #{tpu_custom_call.1} parent=47 // pred_check_branch
        %406 = sbr.rel (%p404) target = $region52
      $region51: #{tpu_custom_call.1} parent=47 // pred_region
        %p407 = scmp.lt.s32.totalorder %s17, 1
        %s408 = scalar_select %p407, %s17, 1
        %s409 = smul.addr %s408, 8
        %s410 = scalar_lea.vmem %s5, %s409
      $region52: #{tpu_custom_call.1} parent=47 // pred_fallthru
        _
    $region48: #{tpu_custom_call.1} parent=5 // pred_fallthru
      _
  $region6: #{tpu_custom_call.1} parent=0 // loop_footer
    %s15 = sadd.s32 1, %s11
  $region7: #{tpu_custom_call.1} parent=0 // loop_footer_branch
    %10 = sbr.rel target = $region3
  $region8: #{tpu_custom_call.1} parent=0 // loop_exit
    _

</llo_original>
